<compile_context>
chip_gen: v5e
topology: v5e:2x2
jax: 0.10.0
libtpu: 0.0.40
codegen_flags: <defaults>
</compile_context>

<pallas_src>
import jax
import jax.numpy as jnp
from jax.experimental import pallas as pl
from jax.experimental.pallas import tpu as pltpu


def _add_kernel(a_ref, b_ref, o_ref):
    # Elementwise add on one VMEM tile.
    o_ref[...] = a_ref[...] + b_ref[...]


# Candidate lane widths (all multiples of 128); widest one that divides n wins.
_LANE_CANDIDATES = (8192, 6272, 4096, 3072, 2048, 1536, 1024, 512, 384, 256, 128)

# Per-operand cap for one block.  With default double-buffering the pipeline
# holds ~6 block-sized buffers (2 inputs + 1 output, 2 deep), so 2 MiB keeps
# peak VMEM ~12 MiB -- under even v5e's 16 MiB default scoped limit.
_BLOCK_BYTES_BUDGET = 2 * 1024 * 1024


def _sublane_quantum(dtype):
    """Sublane packing quantum: 8 rows for 32-bit, 16 for bf16, 32 for int8/fp8."""
    itemsize = jnp.dtype(dtype).itemsize
    return max(8, 32 // max(1, itemsize))


def _choose_layout(n, dtype):
    """Pick a lane-dense slab and row blocking for a flat size n.

    Returns (lane, rows, pad, block_rows, num_blocks).
    """
    quantum = _sublane_quantum(dtype)
    itemsize = jnp.dtype(dtype).itemsize

    lane = None
    for cand in _LANE_CANDIDATES:
        if n % cand == 0:
            lane = cand
            break

    if lane is not None:
        rows = n // lane
        pad = 0
    else:
        # Fallback for sizes not divisible by 128: pad the flat array up to a
        # (quantum x 512)-aligned slab (wrapper-side pad + post-slice).
        lane = 512
        chunk = lane * quantum
        n_pad = pl.cdiv(n, chunk) * chunk
        rows = n_pad // lane
        pad = n_pad - n

    block_bytes = rows * lane * itemsize
    if block_bytes <= _BLOCK_BYTES_BUDGET:
        # Whole array as ONE block -> single grid step, no per-step overhead.
        # Spec shape [1,48,56,56] f32: lane=6272, rows=24, 1 block of ~602 KB.
        return lane, rows, pad, rows, 1

    # Large inputs: row-blocked grid with a per-block VMEM cap.  block_rows is
    # a multiple of the sublane quantum so stores stay wide and unmasked; a
    # ragged final block is handled (masked) by Pallas automatically.
    max_block_rows = (_BLOCK_BYTES_BUDGET // (lane * itemsize)) // quantum * quantum
    max_block_rows = max(quantum, max_block_rows)
    block_rows = min(rows, max_block_rows)
    num_blocks = pl.cdiv(rows, block_rows)
    return lane, rows, pad, block_rows, num_blocks


def pallas_add(x, y):
    """Elementwise x + y via a Pallas TPU kernel."""
    assert x.shape == y.shape, (x.shape, y.shape)
    assert x.dtype == y.dtype, (x.dtype, y.dtype)
    orig_shape = x.shape
    n = x.size
    itemsize = jnp.dtype(x.dtype).itemsize

    lane, rows, pad, block_rows, num_blocks = _choose_layout(n, x.dtype)

    if pad:
        x2 = jnp.pad(x.reshape(-1), (0, pad)).reshape(rows, lane)
        y2 = jnp.pad(y.reshape(-1), (0, pad)).reshape(rows, lane)
    else:
        x2 = x.reshape(rows, lane)
        y2 = y.reshape(rows, lane)

    out2 = pl.pallas_call(
        _add_kernel,
        out_shape=jax.ShapeDtypeStruct((rows, lane), x.dtype),
        grid=(num_blocks,),
        in_specs=[
            pl.BlockSpec((block_rows, lane), lambda i: (i, 0)),
            pl.BlockSpec((block_rows, lane), lambda i: (i, 0)),
        ],
        out_specs=pl.BlockSpec((block_rows, lane), lambda i: (i, 0)),
        compiler_params=pltpu.CompilerParams(
            # Single-step grid: semantics irrelevant; multi-step: let the
            # compiler shard independent row blocks across cores if it can.
            dimension_semantics=(
                ("arbitrary",) if num_blocks == 1 else ("parallel",)
            ),
        ),
        cost_estimate=pl.CostEstimate(
            flops=n,
            transcendentals=0,
            bytes_accessed=3 * n * itemsize,
        ),
    )(x2, y2)

    if pad:
        return out2.reshape(-1)[:n].reshape(orig_shape)
    return out2.reshape(orig_shape)


class M:
    """JAX/Pallas equivalent of the PyTorch module M (no parameters)."""

    def __call__(self, x130, x115):
        # x131 = operator.add(x130, x115)
        return pallas_add(x130, x115)


if __name__ == "__main__":
    key = jax.random.PRNGKey(0)
    k1, k2 = jax.random.split(key)

    # Shape matching the module's forward: [1, 48, 56, 56] NCHW, float32.
    shape = (1, 48, 56, 56)
    x130 = jax.random.normal(k1, shape, dtype=jnp.float32)
    x115 = jax.random.normal(k2, shape, dtype=jnp.float32)

    m = M()
    out = jax.block_until_ready(m(x130, x115))

    # Verify against plain JAX reference.
    ref = x130 + x115
    assert out.shape == shape and out.dtype == jnp.float32
    assert jnp.allclose(out, ref, atol=1e-6, rtol=1e-6)

    print("KERNEL_OK")
</pallas_src>

<mosaic_0001>
module attributes {stable_mosaic.version = 11 : i64} {
  func.func @_add_kernel(%arg0: i32, %arg1: memref<24x6272xf32, #tpu.memory_space<vmem>>, %arg2: memref<24x6272xf32, #tpu.memory_space<vmem>>, %arg3: memref<24x6272xf32, #tpu.memory_space<vmem>>) attributes {dimension_semantics = [#tpu.dimension_semantics<arbitrary>], iteration_bounds = array<i64: 1>, scalar_prefetch = 0 : i64, scratch_operands = 0 : i64, tpu.core_type = #tpu.core_type<tc>, window_params = [{transform_indices = @transform_0, window_bounds = array<i64: 24, 6272>}, {transform_indices = @transform_1, window_bounds = array<i64: 24, 6272>}, {transform_indices = @transform_2, window_bounds = array<i64: 24, 6272>}]} {
    %c0 = arith.constant 0 : index
    %c0_0 = arith.constant 0 : index
    %0 = vector.load %arg1[%c0, %c0_0] : memref<24x6272xf32, #tpu.memory_space<vmem>>, vector<24x6272xf32>
    %c0_1 = arith.constant 0 : index
    %c0_2 = arith.constant 0 : index
    %1 = vector.load %arg2[%c0_1, %c0_2] : memref<24x6272xf32, #tpu.memory_space<vmem>>, vector<24x6272xf32>
    %2 = arith.addf %0, %1 : vector<24x6272xf32>
    %c0_3 = arith.constant 0 : index
    %c0_4 = arith.constant 0 : index
    %3 = vector.load %arg3[%c0_3, %c0_4] : memref<24x6272xf32, #tpu.memory_space<vmem>>, vector<24x6272xf32>
    tpu.vector_store %arg3[%c0_3, %c0_4], %2 {strides = array<i32>} : memref<24x6272xf32, #tpu.memory_space<vmem>>, vector<24x6272xf32>,
    return
  }
  func.func @transform_0(%arg0: i32) -> (i32, i32) {
    %c0_i32 = arith.constant 0 : i32
    %c0_i32_0 = arith.constant 0 : i32
    return %arg0, %c0_i32 : i32, i32
  }
  func.func @transform_1(%arg0: i32) -> (i32, i32) {
    %c0_i32 = arith.constant 0 : i32
    %c0_i32_0 = arith.constant 0 : i32
    return %arg0, %c0_i32 : i32, i32
  }
  func.func @transform_2(%arg0: i32) -> (i32, i32) {
    %c0_i32 = arith.constant 0 : i32
    %c0_i32_0 = arith.constant 0 : i32
    return %arg0, %c0_i32 : i32, i32
  }
}

</mosaic_0001>

<llo_original>
// kernel: tpu_custom_call.1
$region0: #{tpu_custom_call.1}
  #allocation0 [shape = 'u32[]', space=smem, size = 0x4, offset = 0x4, fixed_abs, tag = 'smem constant byte address 0x4 - core index']
  #allocation1 [shape = 'u32[72,128]{1,0:T(1,128)}', space=vmem, size = 0x9000, scoped, tag = 'internal scratch']
  %s0 = inlined_call_operand.hbm [shape: f32[24,6272], index: 0, kind: input, shape index: {}]
  %s1 = inlined_call_operand.hbm [shape: f32[24,6272], index: 1, kind: input, shape index: {}]
  %s2 = inlined_call_operand.hbm [shape: f32[24,6272], index: 2, kind: output, shape index: {}]
  %s3 = sld [smem:[#allocation0]]
  $region26: #{tpu_custom_call.1} parent=0
    _
  %s5 = ssub.s32 1, %s3
  %s6 = scalar_select 0, %s5, %s3
  $region1: #{tpu_custom_call.1} parent=0
    #allocation2 [shape = 'u8[602112]{0}', space=vmem, size = 0x93000, scoped, tag = 'input window, operand 0, single buffered']
    #allocation3 [shape = 's32[1]{0}', space=sflag, size = 0x4, scoped, tag = 'scoped memory for tpu_custom_call.1']
    #allocation4 [shape = 's32[1]{0}', space=sflag, size = 0x4, scoped, tag = 'scoped memory for tpu_custom_call.1']
    #allocation5 [shape = 'u8[602112]{0}', space=vmem, size = 0x93000, scoped, tag = 'input window, operand 1, single buffered']
    #allocation6 [shape = 's32[1]{0}', space=sflag, size = 0x4, scoped, tag = 'scoped memory for tpu_custom_call.1']
    #allocation7 [shape = 'u8[602112]{0}', space=vmem, size = 0x93000, scoped, tag = 'output window, operand 0, single buffered']
    %7 = vsyncpa [#allocation3], 0
    %8 = vsyncpa [#allocation6], 0
    %9 = vsyncpa [#allocation4], 0
    // Predicated region
    $region2: #{tpu_custom_call.1} parent=1 // pred_check
      _
    $region3: #{tpu_custom_call.1} parent=1 // pred_check_branch
      %11 = sbr.rel (0) target = $region5
    $region4: #{tpu_custom_call.1} parent=1 // pred_region
      %13 = vsyncadd [#allocation3], 0
      %s14 = sshll.u32 %s0, 4
      %s15 = int_to_ptr.hbm [resolvable:$true] %s14
      %s16 = sshll.u32 [#allocation2], 4
      %s17 = int_to_ptr.vmem [resolvable:$true] %s16
      %22 = dma.hbm_to_vmem [thread:$0]  %s15, 18816, %s17, [#allocation3], 6272, 6272, 392
    $region5: #{tpu_custom_call.1} parent=1 // pred_fallthru
      _
    // Predicated region
    $region6: #{tpu_custom_call.1} parent=1 // pred_check
      _
    $region7: #{tpu_custom_call.1} parent=1 // pred_check_branch
      %24 = sbr.rel (0) target = $region9
    $region8: #{tpu_custom_call.1} parent=1 // pred_region
      %26 = vsyncadd [#allocation6], 0
      %s27 = sshll.u32 %s1, 4
      %s28 = int_to_ptr.hbm [resolvable:$true] %s27
      %s29 = sshll.u32 [#allocation5], 4
      %s30 = int_to_ptr.vmem [resolvable:$true] %s29
      %35 = dma.hbm_to_vmem [thread:$0]  %s28, 18816, %s30, [#allocation6], 6272, 6272, 392
    $region9: #{tpu_custom_call.1} parent=1 // pred_fallthru
      _
    // Predicated region
    $region10: #{tpu_custom_call.1} parent=1 // pred_check
      _
    $region11: #{tpu_custom_call.1} parent=1 // pred_check_branch
      %37 = sbr.rel (0) target = $region13
    $region12: #{tpu_custom_call.1} parent=1 // pred_region
      %39 = dma.done [#allocation3], 18816
    $region13: #{tpu_custom_call.1} parent=1 // pred_fallthru
      _
    // Predicated region
    $region14: #{tpu_custom_call.1} parent=1 // pred_check
      _
    $region15: #{tpu_custom_call.1} parent=1 // pred_check_branch
      %41 = sbr.rel (0) target = $region17
    $region16: #{tpu_custom_call.1} parent=1 // pred_region
      %43 = dma.done [#allocation6], 18816
    $region17: #{tpu_custom_call.1} parent=1 // pred_fallthru
      _
    %v44 = vld [vmem:[#allocation2] sm:$0xff]
    %v45 = vld [vmem:[#allocation2 + $0x8] sm:$0xff]
    %v46 = vld [vmem:[#allocation2 + $0x10] sm:$0xff]
    %v47 = vld [vmem:[#allocation2 + $0x18] sm:$0xff]
    %v48 = vld [vmem:[#allocation2 + $0x20] sm:$0xff]
    %v49 = vld [vmem:[#allocation2 + $0x28] sm:$0xff]
    %v50 = vld [vmem:[#allocation2 + $0x30] sm:$0xff]
    %v51 = vld [vmem:[#allocation2 + $0x38] sm:$0xff]
    %v52 = vld [vmem:[#allocation2 + $0x40] sm:$0xff]
    %v53 = vld [vmem:[#allocation2 + $0x48] sm:$0xff]
    %v54 = vld [vmem:[#allocation2 + $0x50] sm:$0xff]
    %v55 = vld [vmem:[#allocation2 + $0x58] sm:$0xff]
    %v56 = vld [vmem:[#allocation2 + $0x60] sm:$0xff]
    %v57 = vld [vmem:[#allocation2 + $0x68] sm:$0xff]
    %v58 = vld [vmem:[#allocation2 + $0x70] sm:$0xff]
    %v59 = vld [vmem:[#allocation2 + $0x78] sm:$0xff]
    %v60 = vld [vmem:[#allocation2 + $0x80] sm:$0xff]
    %v61 = vld [vmem:[#allocation2 + $0x88] sm:$0xff]
    %v62 = vld [vmem:[#allocation2 + $0x90] sm:$0xff]
    %v63 = vld [vmem:[#allocation2 + $0x98] sm:$0xff]
    %v64 = vld [vmem:[#allocation2 + $0xa0] sm:$0xff]
    %v65 = vld [vmem:[#allocation2 + $0xa8] sm:$0xff]
    %v66 = vld [vmem:[#allocation2 + $0xb0] sm:$0xff]
    %v67 = vld [vmem:[#allocation2 + $0xb8] sm:$0xff]
    %v68 = vld [vmem:[#allocation2 + $0xc0] sm:$0xff]
    %v69 = vld [vmem:[#allocation2 + $0xc8] sm:$0xff]
    %v70 = vld [vmem:[#allocation2 + $0xd0] sm:$0xff]
    %v71 = vld [vmem:[#allocation2 + $0xd8] sm:$0xff]
    %v72 = vld [vmem:[#allocation2 + $0xe0] sm:$0xff]
    %v73 = vld [vmem:[#allocation2 + $0xe8] sm:$0xff]
    %v74 = vld [vmem:[#allocation2 + $0xf0] sm:$0xff]
    %v75 = vld [vmem:[#allocation2 + $0xf8] sm:$0xff]
    %v76 = vld [vmem:[#allocation2 + $0x100] sm:$0xff]
    %v77 = vld [vmem:[#allocation2 + $0x108] sm:$0xff]
    %v78 = vld [vmem:[#allocation2 + $0x110] sm:$0xff]
    %v79 = vld [vmem:[#allocation2 + $0x118] sm:$0xff]
    %v80 = vld [vmem:[#allocation2 + $0x120] sm:$0xff]
    %v81 = vld [vmem:[#allocation2 + $0x128] sm:$0xff]
    %v82 = vld [vmem:[#allocation2 + $0x130] sm:$0xff]
    %v83 = vld [vmem:[#allocation2 + $0x138] sm:$0xff]
    %v84 = vld [vmem:[#allocation2 + $0x140] sm:$0xff]
    %v85 = vld [vmem:[#allocation2 + $0x148] sm:$0xff]
    %v86 = vld [vmem:[#allocation2 + $0x150] sm:$0xff]
    %v87 = vld [vmem:[#allocation2 + $0x158] sm:$0xff]
    %v88 = vld [vmem:[#allocation2 + $0x160] sm:$0xff]
    %v89 = vld [vmem:[#allocation2 + $0x168] sm:$0xff]
    %v90 = vld [vmem:[#allocation2 + $0x170] sm:$0xff]
    %v91 = vld [vmem:[#allocation2 + $0x178] sm:$0xff]
    %v92 = vld [vmem:[#allocation2 + $0x180] sm:$0xff]
    %v93 = vld [vmem:[#allocation2 + $0x188] sm:$0xff]
    %v94 = vld [vmem:[#allocation2 + $0x190] sm:$0xff]
    %v95 = vld [vmem:[#allocation2 + $0x198] sm:$0xff]
    %v96 = vld [vmem:[#allocation2 + $0x1a0] sm:$0xff]
    %v97 = vld [vmem:[#allocation2 + $0x1a8] sm:$0xff]
    %v98 = vld [vmem:[#allocation2 + $0x1b0] sm:$0xff]
    %v99 = vld [vmem:[#allocation2 + $0x1b8] sm:$0xff]
    %v100 = vld [vmem:[#allocation2 + $0x1c0] sm:$0xff]
    %v101 = vld [vmem:[#allocation2 + $0x1c8] sm:$0xff]
    %v102 = vld [vmem:[#allocation2 + $0x1d0] sm:$0xff]
    %v103 = vld [vmem:[#allocation2 + $0x1d8] sm:$0xff]
    %v104 = vld [vmem:[#allocation2 + $0x1e0] sm:$0xff]
    %v105 = vld [vmem:[#allocation2 + $0x1e8] sm:$0xff]
    %v106 = vld [vmem:[#allocation2 + $0x1f0] sm:$0xff]
    %v107 = vld [vmem:[#allocation2 + $0x1f8] sm:$0xff]
    %v108 = vld [vmem:[#allocation2 + $0x200] sm:$0xff]
    %v109 = vld [vmem:[#allocation2 + $0x208] sm:$0xff]
    %v110 = vld [vmem:[#allocation2 + $0x210] sm:$0xff]
    %v111 = vld [vmem:[#allocation2 + $0x218] sm:$0xff]
    %v112 = vld [vmem:[#allocation2 + $0x220] sm:$0xff]
    %v113 = vld [vmem:[#allocation2 + $0x228] sm:$0xff]
    %v114 = vld [vmem:[#allocation2 + $0x230] sm:$0xff]
    %v115 = vld [vmem:[#allocation2 + $0x238] sm:$0xff]
    %v116 = vld [vmem:[#allocation2 + $0x240] sm:$0xff]
    %v117 = vld [vmem:[#allocation2 + $0x248] sm:$0xff]
    %v118 = vld [vmem:[#allocation2 + $0x250] sm:$0xff]
    %v119 = vld [vmem:[#allocation2 + $0x258] sm:$0xff]
    %v120 = vld [vmem:[#allocation2 + $0x260] sm:$0xff]
    %v121 = vld [vmem:[#allocation2 + $0x268] sm:$0xff]
    %v122 = vld [vmem:[#allocation2 + $0x270] sm:$0xff]
    %v123 = vld [vmem:[#allocation2 + $0x278] sm:$0xff]
    %v124 = vld [vmem:[#allocation2 + $0x280] sm:$0xff]
    %v125 = vld [vmem:[#allocation2 + $0x288] sm:$0xff]
    %v126 = vld [vmem:[#allocation2 + $0x290] sm:$0xff]
    %v127 = vld [vmem:[#allocation2 + $0x298] sm:$0xff]
    %v128 = vld [vmem:[#allocation2 + $0x2a0] sm:$0xff]
    %v129 = vld [vmem:[#allocation2 + $0x2a8] sm:$0xff]
    %v130 = vld [vmem:[#allocation2 + $0x2b0] sm:$0xff]
    %v131 = vld [vmem:[#allocation2 + $0x2b8] sm:$0xff]
    %v132 = vld [vmem:[#allocation2 + $0x2c0] sm:$0xff]
    %v133 = vld [vmem:[#allocation2 + $0x2c8] sm:$0xff]
    %v134 = vld [vmem:[#allocation2 + $0x2d0] sm:$0xff]
    %v135 = vld [vmem:[#allocation2 + $0x2d8] sm:$0xff]
    %v136 = vld [vmem:[#allocation2 + $0x2e0] sm:$0xff]
    %v137 = vld [vmem:[#allocation2 + $0x2e8] sm:$0xff]
    %v138 = vld [vmem:[#allocation2 + $0x2f0] sm:$0xff]
    %v139 = vld [vmem:[#allocation2 + $0x2f8] sm:$0xff]
    %v140 = vld [vmem:[#allocation2 + $0x300] sm:$0xff]
    %v141 = vld [vmem:[#allocation2 + $0x308] sm:$0xff]
    %v142 = vld [vmem:[#allocation2 + $0x310] sm:$0xff]
    %v143 = vld [vmem:[#allocation2 + $0x318] sm:$0xff]
    %v144 = vld [vmem:[#allocation2 + $0x320] sm:$0xff]
    %v145 = vld [vmem:[#allocation2 + $0x328] sm:$0xff]
    %v146 = vld [vmem:[#allocation2 + $0x330] sm:$0xff]
    %v147 = vld [vmem:[#allocation2 + $0x338] sm:$0xff]
    %v148 = vld [vmem:[#allocation2 + $0x340] sm:$0xff]
    %v149 = vld [vmem:[#allocation2 + $0x348] sm:$0xff]
    %v150 = vld [vmem:[#allocation2 + $0x350] sm:$0xff]
    %v151 = vld [vmem:[#allocation2 + $0x358] sm:$0xff]
    %v152 = vld [vmem:[#allocation2 + $0x360] sm:$0xff]
    %v153 = vld [vmem:[#allocation2 + $0x368] sm:$0xff]
    %v154 = vld [vmem:[#allocation2 + $0x370] sm:$0xff]
    %v155 = vld [vmem:[#allocation2 + $0x378] sm:$0xff]
    %v156 = vld [vmem:[#allocation2 + $0x380] sm:$0xff]
    %v157 = vld [vmem:[#allocation2 + $0x388] sm:$0xff]
    %v158 = vld [vmem:[#allocation2 + $0x390] sm:$0xff]
    %v159 = vld [vmem:[#allocation2 + $0x398] sm:$0xff]
    %v160 = vld [vmem:[#allocation2 + $0x3a0] sm:$0xff]
    %v161 = vld [vmem:[#allocation2 + $0x3a8] sm:$0xff]
    %v162 = vld [vmem:[#allocation2 + $0x3b0] sm:$0xff]
    %v163 = vld [vmem:[#allocation2 + $0x3b8] sm:$0xff]
    %v164 = vld [vmem:[#allocation2 + $0x3c0] sm:$0xff]
    %v165 = vld [vmem:[#allocation2 + $0x3c8] sm:$0xff]
    %v166 = vld [vmem:[#allocation2 + $0x3d0] sm:$0xff]
    %v167 = vld [vmem:[#allocation2 + $0x3d8] sm:$0xff]
    %v168 = vld [vmem:[#allocation2 + $0x3e0] sm:$0xff]
    %v169 = vld [vmem:[#allocation2 + $0x3e8] sm:$0xff]
    %v170 = vld [vmem:[#allocation2 + $0x3f0] sm:$0xff]
    %v171 = vld [vmem:[#allocation2 + $0x3f8] sm:$0xff]
    %v172 = vld [vmem:[#allocation2 + $0x400] sm:$0xff]
    %v173 = vld [vmem:[#allocation2 + $0x408] sm:$0xff]
    %v174 = vld [vmem:[#allocation2 + $0x410] sm:$0xff]
    %v175 = vld [vmem:[#allocation2 + $0x418] sm:$0xff]
    %v176 = vld [vmem:[#allocation2 + $0x420] sm:$0xff]
    %v177 = vld [vmem:[#allocation2 + $0x428] sm:$0xff]
    %v178 = vld [vmem:[#allocation2 + $0x430] sm:$0xff]
    %v179 = vld [vmem:[#allocation2 + $0x438] sm:$0xff]
    %v180 = vld [vmem:[#allocation2 + $0x440] sm:$0xff]
    %v181 = vld [vmem:[#allocation2 + $0x448] sm:$0xff]
    %v182 = vld [vmem:[#allocation2 + $0x450] sm:$0xff]
    %v183 = vld [vmem:[#allocation2 + $0x458] sm:$0xff]
    %v184 = vld [vmem:[#allocation2 + $0x460] sm:$0xff]
    %v185 = vld [vmem:[#allocation2 + $0x468] sm:$0xff]
    %v186 = vld [vmem:[#allocation2 + $0x470] sm:$0xff]
    %v187 = vld [vmem:[#allocation2 + $0x478] sm:$0xff]
    %v188 = vld [vmem:[#allocation2 + $0x480] sm:$0xff]
    %v189 = vld [vmem:[#allocation2 + $0x488] sm:$0xff]
    %v190 = vld [vmem:[#allocation2 + $0x490] sm:$0xff]
    %v191 = vld [vmem:[#allocation5] sm:$0xff]
    %v192 = vld [vmem:[#allocation5 + $0x8] sm:$0xff]
    %v193 = vld [vmem:[#allocation5 + $0x10] sm:$0xff]
    %v194 = vld [vmem:[#allocation5 + $0x18] sm:$0xff]
    %v195 = vld [vmem:[#allocation5 + $0x20] sm:$0xff]
    %v196 = vld [vmem:[#allocation5 + $0x28] sm:$0xff]
    %v197 = vld [vmem:[#allocation5 + $0x30] sm:$0xff]
    %v198 = vld [vmem:[#allocation5 + $0x38] sm:$0xff]
    %v199 = vld [vmem:[#allocation5 + $0x40] sm:$0xff]
    %v200 = vld [vmem:[#allocation5 + $0x48] sm:$0xff]
    %v201 = vld [vmem:[#allocation5 + $0x50] sm:$0xff]
    %v202 = vld [vmem:[#allocation5 + $0x58] sm:$0xff]
    %v203 = vld [vmem:[#allocation5 + $0x60] sm:$0xff]
    %v204 = vld [vmem:[#allocation5 + $0x68] sm:$0xff]
    %v205 = vld [vmem:[#allocation5 + $0x70] sm:$0xff]
    %v206 = vld [vmem:[#allocation5 + $0x78] sm:$0xff]
    %v207 = vld [vmem:[#allocation5 + $0x80] sm:$0xff]
    %v208 = vld [vmem:[#allocation5 + $0x88] sm:$0xff]
    %v209 = vld [vmem:[#allocation5 + $0x90] sm:$0xff]
    %v210 = vld [vmem:[#allocation5 + $0x98] sm:$0xff]
    %v211 = vld [vmem:[#allocation5 + $0xa0] sm:$0xff]
    %v212 = vld [vmem:[#allocation5 + $0xa8] sm:$0xff]
    %v213 = vld [vmem:[#allocation5 + $0xb0] sm:$0xff]
    %v214 = vld [vmem:[#allocation5 + $0xb8] sm:$0xff]
    %v215 = vld [vmem:[#allocation5 + $0xc0] sm:$0xff]
    %v216 = vld [vmem:[#allocation5 + $0xc8] sm:$0xff]
    %v217 = vld [vmem:[#allocation5 + $0xd0] sm:$0xff]
    %v218 = vld [vmem:[#allocation5 + $0xd8] sm:$0xff]
    %v219 = vld [vmem:[#allocation5 + $0xe0] sm:$0xff]
    %v220 = vld [vmem:[#allocation5 + $0xe8] sm:$0xff]
    %v221 = vld [vmem:[#allocation5 + $0xf0] sm:$0xff]
    %v222 = vld [vmem:[#allocation5 + $0xf8] sm:$0xff]
    %v223 = vld [vmem:[#allocation5 + $0x100] sm:$0xff]
    %v224 = vld [vmem:[#allocation5 + $0x108] sm:$0xff]
    %v225 = vld [vmem:[#allocation5 + $0x110] sm:$0xff]
    %v226 = vld [vmem:[#allocation5 + $0x118] sm:$0xff]
    %v227 = vld [vmem:[#allocation5 + $0x120] sm:$0xff]
    %v228 = vld [vmem:[#allocation5 + $0x128] sm:$0xff]
    %v229 = vld [vmem:[#allocation5 + $0x130] sm:$0xff]
    %v230 = vld [vmem:[#allocation5 + $0x138] sm:$0xff]
    %v231 = vld [vmem:[#allocation5 + $0x140] sm:$0xff]
    %v232 = vld [vmem:[#allocation5 + $0x148] sm:$0xff]
    %v233 = vld [vmem:[#allocation5 + $0x150] sm:$0xff]
    %v234 = vld [vmem:[#allocation5 + $0x158] sm:$0xff]
    %v235 = vld [vmem:[#allocation5 + $0x160] sm:$0xff]
    %v236 = vld [vmem:[#allocation5 + $0x168] sm:$0xff]
    %v237 = vld [vmem:[#allocation5 + $0x170] sm:$0xff]
    %v238 = vld [vmem:[#allocation5 + $0x178] sm:$0xff]
    %v239 = vld [vmem:[#allocation5 + $0x180] sm:$0xff]
    %v240 = vld [vmem:[#allocation5 + $0x188] sm:$0xff]
    %v241 = vld [vmem:[#allocation5 + $0x190] sm:$0xff]
    %v242 = vld [vmem:[#allocation5 + $0x198] sm:$0xff]
    %v243 = vld [vmem:[#allocation5 + $0x1a0] sm:$0xff]
    %v244 = vld [vmem:[#allocation5 + $0x1a8] sm:$0xff]
    %v245 = vld [vmem:[#allocation5 + $0x1b0] sm:$0xff]
    %v246 = vld [vmem:[#allocation5 + $0x1b8] sm:$0xff]
    %v247 = vld [vmem:[#allocation5 + $0x1c0] sm:$0xff]
    %v248 = vld [vmem:[#allocation5 + $0x1c8] sm:$0xff]
    %v249 = vld [vmem:[#allocation5 + $0x1d0] sm:$0xff]
    %v250 = vld [vmem:[#allocation5 + $0x1d8] sm:$0xff]
    %v251 = vld [vmem:[#allocation5 + $0x1e0] sm:$0xff]
    %v252 = vld [vmem:[#allocation5 + $0x1e8] sm:$0xff]
    %v253 = vld [vmem:[#allocation5 + $0x1f0] sm:$0xff]
    %v254 = vld [vmem:[#allocation5 + $0x1f8] sm:$0xff]
    %v255 = vld [vmem:[#allocation5 + $0x200] sm:$0xff]
    %v256 = vld [vmem:[#allocation5 + $0x208] sm:$0xff]
    %v257 = vld [vmem:[#allocation5 + $0x210] sm:$0xff]
    %v258 = vld [vmem:[#allocation5 + $0x218] sm:$0xff]
    %v259 = vld [vmem:[#allocation5 + $0x220] sm:$0xff]
    %v260 = vld [vmem:[#allocation5 + $0x228] sm:$0xff]
    %v261 = vld [vmem:[#allocation5 + $0x230] sm:$0xff]
    %v262 = vld [vmem:[#allocation5 + $0x238] sm:$0xff]
    %v263 = vld [vmem:[#allocation5 + $0x240] sm:$0xff]
    %v264 = vld [vmem:[#allocation5 + $0x248] sm:$0xff]
    %v265 = vld [vmem:[#allocation5 + $0x250] sm:$0xff]
    %v266 = vld [vmem:[#allocation5 + $0x258] sm:$0xff]
    %v267 = vld [vmem:[#allocation5 + $0x260] sm:$0xff]
    %v268 = vld [vmem:[#allocation5 + $0x268] sm:$0xff]
    %v269 = vld [vmem:[#allocation5 + $0x270] sm:$0xff]
    %v270 = vld [vmem:[#allocation5 + $0x278] sm:$0xff]
    %v271 = vld [vmem:[#allocation5 + $0x280] sm:$0xff]
    %v272 = vld [vmem:[#allocation5 + $0x288] sm:$0xff]
    %v273 = vld [vmem:[#allocation5 + $0x290] sm:$0xff]
    %v274 = vld [vmem:[#allocation5 + $0x298] sm:$0xff]
    %v275 = vld [vmem:[#allocation5 + $0x2a0] sm:$0xff]
    %v276 = vld [vmem:[#allocation5 + $0x2a8] sm:$0xff]
    %v277 = vld [vmem:[#allocation5 + $0x2b0] sm:$0xff]
    %v278 = vld [vmem:[#allocation5 + $0x2b8] sm:$0xff]
    %v279 = vld [vmem:[#allocation5 + $0x2c0] sm:$0xff]
    %v280 = vld [vmem:[#allocation5 + $0x2c8] sm:$0xff]
    %v281 = vld [vmem:[#allocation5 + $0x2d0] sm:$0xff]
    %v282 = vld [vmem:[#allocation5 + $0x2d8] sm:$0xff]
    %v283 = vld [vmem:[#allocation5 + $0x2e0] sm:$0xff]
    %v284 = vld [vmem:[#allocation5 + $0x2e8] sm:$0xff]
    %v285 = vld [vmem:[#allocation5 + $0x2f0] sm:$0xff]
    %v286 = vld [vmem:[#allocation5 + $0x2f8] sm:$0xff]
    %v287 = vld [vmem:[#allocation5 + $0x300] sm:$0xff]
    %v288 = vld [vmem:[#allocation5 + $0x308] sm:$0xff]
    %v289 = vld [vmem:[#allocation5 + $0x310] sm:$0xff]
    %v290 = vld [vmem:[#allocation5 + $0x318] sm:$0xff]
    %v291 = vld [vmem:[#allocation5 + $0x320] sm:$0xff]
    %v292 = vld [vmem:[#allocation5 + $0x328] sm:$0xff]
    %v293 = vld [vmem:[#allocation5 + $0x330] sm:$0xff]
    %v294 = vld [vmem:[#allocation5 + $0x338] sm:$0xff]
    %v295 = vld [vmem:[#allocation5 + $0x340] sm:$0xff]
    %v296 = vld [vmem:[#allocation5 + $0x348] sm:$0xff]
    %v297 = vld [vmem:[#allocation5 + $0x350] sm:$0xff]
    %v298 = vld [vmem:[#allocation5 + $0x358] sm:$0xff]
    %v299 = vld [vmem:[#allocation5 + $0x360] sm:$0xff]
    %v300 = vld [vmem:[#allocation5 + $0x368] sm:$0xff]
    %v301 = vld [vmem:[#allocation5 + $0x370] sm:$0xff]
    %v302 = vld [vmem:[#allocation5 + $0x378] sm:$0xff]
    %v303 = vld [vmem:[#allocation5 + $0x380] sm:$0xff]
    %v304 = vld [vmem:[#allocation5 + $0x388] sm:$0xff]
    %v305 = vld [vmem:[#allocation5 + $0x390] sm:$0xff]
    %v306 = vld [vmem:[#allocation5 + $0x398] sm:$0xff]
    %v307 = vld [vmem:[#allocation5 + $0x3a0] sm:$0xff]
    %v308 = vld [vmem:[#allocation5 + $0x3a8] sm:$0xff]
    %v309 = vld [vmem:[#allocation5 + $0x3b0] sm:$0xff]
    %v310 = vld [vmem:[#allocation5 + $0x3b8] sm:$0xff]
    %v311 = vld [vmem:[#allocation5 + $0x3c0] sm:$0xff]
    %v312 = vld [vmem:[#allocation5 + $0x3c8] sm:$0xff]
    %v313 = vld [vmem:[#allocation5 + $0x3d0] sm:$0xff]
    %v314 = vld [vmem:[#allocation5 + $0x3d8] sm:$0xff]
    %v315 = vld [vmem:[#allocation5 + $0x3e0] sm:$0xff]
    %v316 = vld [vmem:[#allocation5 + $0x3e8] sm:$0xff]
    %v317 = vld [vmem:[#allocation5 + $0x3f0] sm:$0xff]
    %v318 = vld [vmem:[#allocation5 + $0x3f8] sm:$0xff]
    %v319 = vld [vmem:[#allocation5 + $0x400] sm:$0xff]
    %v320 = vld [vmem:[#allocation5 + $0x408] sm:$0xff]
    %v321 = vld [vmem:[#allocation5 + $0x410] sm:$0xff]
    %v322 = vld [vmem:[#allocation5 + $0x418] sm:$0xff]
    %v323 = vld [vmem:[#allocation5 + $0x420] sm:$0xff]
    %v324 = vld [vmem:[#allocation5 + $0x428] sm:$0xff]
    %v325 = vld [vmem:[#allocation5 + $0x430] sm:$0xff]
    %v326 = vld [vmem:[#allocation5 + $0x438] sm:$0xff]
    %v327 = vld [vmem:[#allocation5 + $0x440] sm:$0xff]
    %v328 = vld [vmem:[#allocation5 + $0x448] sm:$0xff]
    %v329 = vld [vmem:[#allocation5 + $0x450] sm:$0xff]
    %v330 = vld [vmem:[#allocation5 + $0x458] sm:$0xff]
    %v331 = vld [vmem:[#allocation5 + $0x460] sm:$0xff]
    %v332 = vld [vmem:[#allocation5 + $0x468] sm:$0xff]
    %v333 = vld [vmem:[#allocation5 + $0x470] sm:$0xff]
    %v334 = vld [vmem:[#allocation5 + $0x478] sm:$0xff]
    %v335 = vld [vmem:[#allocation5 + $0x480] sm:$0xff]
    %v336 = vld [vmem:[#allocation5 + $0x488] sm:$0xff]
    %v337 = vld [vmem:[#allocation5 + $0x490] sm:$0xff]
    %v338 = vadd.f32 %v44, %v191
    %v339 = vadd.f32 %v45, %v192
    %v340 = vadd.f32 %v46, %v193
    %v341 = vadd.f32 %v47, %v194
    %v342 = vadd.f32 %v48, %v195
    %v343 = vadd.f32 %v49, %v196
    %v344 = vadd.f32 %v50, %v197
    %v345 = vadd.f32 %v51, %v198
    %v346 = vadd.f32 %v52, %v199
    %v347 = vadd.f32 %v53, %v200
    %v348 = vadd.f32 %v54, %v201
    %v349 = vadd.f32 %v55, %v202
    %v350 = vadd.f32 %v56, %v203
    %v351 = vadd.f32 %v57, %v204
    %v352 = vadd.f32 %v58, %v205
    %v353 = vadd.f32 %v59, %v206
    %v354 = vadd.f32 %v60, %v207
    %v355 = vadd.f32 %v61, %v208
    %v356 = vadd.f32 %v62, %v209
    %v357 = vadd.f32 %v63, %v210
    %v358 = vadd.f32 %v64, %v211
    %v359 = vadd.f32 %v65, %v212
    %v360 = vadd.f32 %v66, %v213
    %v361 = vadd.f32 %v67, %v214
    %v362 = vadd.f32 %v68, %v215
    %v363 = vadd.f32 %v69, %v216
    %v364 = vadd.f32 %v70, %v217
    %v365 = vadd.f32 %v71, %v218
    %v366 = vadd.f32 %v72, %v219
    %v367 = vadd.f32 %v73, %v220
    %v368 = vadd.f32 %v74, %v221
    %v369 = vadd.f32 %v75, %v222
    %v370 = vadd.f32 %v76, %v223
    %v371 = vadd.f32 %v77, %v224
    %v372 = vadd.f32 %v78, %v225
    %v373 = vadd.f32 %v79, %v226
    %v374 = vadd.f32 %v80, %v227
    %v375 = vadd.f32 %v81, %v228
    %v376 = vadd.f32 %v82, %v229
    %v377 = vadd.f32 %v83, %v230
    %v378 = vadd.f32 %v84, %v231
    %v379 = vadd.f32 %v85, %v232
    %v380 = vadd.f32 %v86, %v233
    %v381 = vadd.f32 %v87, %v234
    %v382 = vadd.f32 %v88, %v235
    %v383 = vadd.f32 %v89, %v236
    %v384 = vadd.f32 %v90, %v237
    %v385 = vadd.f32 %v91, %v238
    %v386 = vadd.f32 %v92, %v239
    %v387 = vadd.f32 %v93, %v240
    %v388 = vadd.f32 %v94, %v241
    %v389 = vadd.f32 %v95, %v242
    %v390 = vadd.f32 %v96, %v243
    %v391 = vadd.f32 %v97, %v244
    %v392 = vadd.f32 %v98, %v245
    %v393 = vadd.f32 %v99, %v246
    %v394 = vadd.f32 %v100, %v247
    %v395 = vadd.f32 %v101, %v248
    %v396 = vadd.f32 %v102, %v249
    %v397 = vadd.f32 %v103, %v250
    %v398 = vadd.f32 %v104, %v251
    %v399 = vadd.f32 %v105, %v252
    %v400 = vadd.f32 %v106, %v253
    %v401 = vadd.f32 %v107, %v254
    %v402 = vadd.f32 %v108, %v255
    %v403 = vadd.f32 %v109, %v256
    %v404 = vadd.f32 %v110, %v257
    %v405 = vadd.f32 %v111, %v258
    %v406 = vadd.f32 %v112, %v259
    %v407 = vadd.f32 %v113, %v260
    %v408 = vadd.f32 %v114, %v261
    %v409 = vadd.f32 %v115, %v262
    %v410 = vadd.f32 %v116, %v263
    %v411 = vadd.f32 %v117, %v264
    %v412 = vadd.f32 %v118, %v265
    %v413 = vadd.f32 %v119, %v266
    %v414 = vadd.f32 %v120, %v267
    %v415 = vadd.f32 %v121, %v268
    %v416 = vadd.f32 %v122, %v269
    %v417 = vadd.f32 %v123, %v270
    %v418 = vadd.f32 %v124, %v271
    %v419 = vadd.f32 %v125, %v272
    %v420 = vadd.f32 %v126, %v273
    %v421 = vadd.f32 %v127, %v274
    %v422 = vadd.f32 %v128, %v275
    %v423 = vadd.f32 %v129, %v276
    %v424 = vadd.f32 %v130, %v277
    %v425 = vadd.f32 %v131, %v278
    %v426 = vadd.f32 %v132, %v279
    %v427 = vadd.f32 %v133, %v280
    %v428 = vadd.f32 %v134, %v281
    %v429 = vadd.f32 %v135, %v282
    %v430 = vadd.f32 %v136, %v283
    %v431 = vadd.f32 %v137, %v284
    %v432 = vadd.f32 %v138, %v285
    %v433 = vadd.f32 %v139, %v286
    %v434 = vadd.f32 %v140, %v287
    %v435 = vadd.f32 %v141, %v288
    %v436 = vadd.f32 %v142, %v289
    %v437 = vadd.f32 %v143, %v290
    %v438 = vadd.f32 %v144, %v291
    %v439 = vadd.f32 %v145, %v292
    %v440 = vadd.f32 %v146, %v293
    %v441 = vadd.f32 %v147, %v294
    %v442 = vadd.f32 %v148, %v295
    %v443 = vadd.f32 %v149, %v296
    %v444 = vadd.f32 %v150, %v297
    %v445 = vadd.f32 %v151, %v298
    %v446 = vadd.f32 %v152, %v299
    %v447 = vadd.f32 %v153, %v300
    %v448 = vadd.f32 %v154, %v301
    %v449 = vadd.f32 %v155, %v302
    %v450 = vadd.f32 %v156, %v303
    %v451 = vadd.f32 %v157, %v304
    %v452 = vadd.f32 %v158, %v305
    %v453 = vadd.f32 %v159, %v306
    %v454 = vadd.f32 %v160, %v307
    %v455 = vadd.f32 %v161, %v308
    %v456 = vadd.f32 %v162, %v309
    %v457 = vadd.f32 %v163, %v310
    %v458 = vadd.f32 %v164, %v311
    %v459 = vadd.f32 %v165, %v312
    %v460 = vadd.f32 %v166, %v313
    %v461 = vadd.f32 %v167, %v314
    %v462 = vadd.f32 %v168, %v315
    %v463 = vadd.f32 %v169, %v316
    %v464 = vadd.f32 %v170, %v317
    %v465 = vadd.f32 %v171, %v318
    %v466 = vadd.f32 %v172, %v319
    %v467 = vadd.f32 %v173, %v320
    %v468 = vadd.f32 %v174, %v321
    %v469 = vadd.f32 %v175, %v322
    %v470 = vadd.f32 %v176, %v323
    %v471 = vadd.f32 %v177, %v324
    %v472 = vadd.f32 %v178, %v325
    %v473 = vadd.f32 %v179, %v326
    %v474 = vadd.f32 %v180, %v327
    %v475 = vadd.f32 %v181, %v328
    %v476 = vadd.f32 %v182, %v329
    %v477 = vadd.f32 %v183, %v330
    %v478 = vadd.f32 %v184, %v331
    %v479 = vadd.f32 %v185, %v332
    %v480 = vadd.f32 %v186, %v333
    %v481 = vadd.f32 %v187, %v334
    %v482 = vadd.f32 %v188, %v335
    %v483 = vadd.f32 %v189, %v336
    %v484 = vadd.f32 %v190, %v337
    %485 = vst [vmem:[#allocation7] sm:$0xff] %v338
    %486 = vst [vmem:[#allocation7 + $0x8] sm:$0xff] %v339
    %487 = vst [vmem:[#allocation7 + $0x10] sm:$0xff] %v340
    %488 = vst [vmem:[#allocation7 + $0x18] sm:$0xff] %v341
    %489 = vst [vmem:[#allocation7 + $0x20] sm:$0xff] %v342
    %490 = vst [vmem:[#allocation7 + $0x28] sm:$0xff] %v343
    %491 = vst [vmem:[#allocation7 + $0x30] sm:$0xff] %v344
    %492 = vst [vmem:[#allocation7 + $0x38] sm:$0xff] %v345
    %493 = vst [vmem:[#allocation7 + $0x40] sm:$0xff] %v346
    %494 = vst [vmem:[#allocation7 + $0x48] sm:$0xff] %v347
    %495 = vst [vmem:[#allocation7 + $0x50] sm:$0xff] %v348
    %496 = vst [vmem:[#allocation7 + $0x58] sm:$0xff] %v349
    %497 = vst [vmem:[#allocation7 + $0x60] sm:$0xff] %v350
    %498 = vst [vmem:[#allocation7 + $0x68] sm:$0xff] %v351
    %499 = vst [vmem:[#allocation7 + $0x70] sm:$0xff] %v352
    %500 = vst [vmem:[#allocation7 + $0x78] sm:$0xff] %v353
    %501 = vst [vmem:[#allocation7 + $0x80] sm:$0xff] %v354
    %502 = vst [vmem:[#allocation7 + $0x88] sm:$0xff] %v355
    %503 = vst [vmem:[#allocation7 + $0x90] sm:$0xff] %v356
    %504 = vst [vmem:[#allocation7 + $0x98] sm:$0xff] %v357
    %505 = vst [vmem:[#allocation7 + $0xa0] sm:$0xff] %v358
    %506 = vst [vmem:[#allocation7 + $0xa8] sm:$0xff] %v359
    %507 = vst [vmem:[#allocation7 + $0xb0] sm:$0xff] %v360
    %508 = vst [vmem:[#allocation7 + $0xb8] sm:$0xff] %v361
    %509 = vst [vmem:[#allocation7 + $0xc0] sm:$0xff] %v362
    %510 = vst [vmem:[#allocation7 + $0xc8] sm:$0xff] %v363
    %511 = vst [vmem:[#allocation7 + $0xd0] sm:$0xff] %v364
    %512 = vst [vmem:[#allocation7 + $0xd8] sm:$0xff] %v365
    %513 = vst [vmem:[#allocation7 + $0xe0] sm:$0xff] %v366
    %514 = vst [vmem:[#allocation7 + $0xe8] sm:$0xff] %v367
    %515 = vst [vmem:[#allocation7 + $0xf0] sm:$0xff] %v368
    %516 = vst [vmem:[#allocation7 + $0xf8] sm:$0xff] %v369
    %517 = vst [vmem:[#allocation7 + $0x100] sm:$0xff] %v370
    %518 = vst [vmem:[#allocation7 + $0x108] sm:$0xff] %v371
    %519 = vst [vmem:[#allocation7 + $0x110] sm:$0xff] %v372
    %520 = vst [vmem:[#allocation7 + $0x118] sm:$0xff] %v373
    %521 = vst [vmem:[#allocation7 + $0x120] sm:$0xff] %v374
    %522 = vst [vmem:[#allocation7 + $0x128] sm:$0xff] %v375
    %523 = vst [vmem:[#allocation7 + $0x130] sm:$0xff] %v376
    %524 = vst [vmem:[#allocation7 + $0x138] sm:$0xff] %v377
    %525 = vst [vmem:[#allocation7 + $0x140] sm:$0xff] %v378
    %526 = vst [vmem:[#allocation7 + $0x148] sm:$0xff] %v379
    %527 = vst [vmem:[#allocation7 + $0x150] sm:$0xff] %v380
    %528 = vst [vmem:[#allocation7 + $0x158] sm:$0xff] %v381
    %529 = vst [vmem:[#allocation7 + $0x160] sm:$0xff] %v382
    %530 = vst [vmem:[#allocation7 + $0x168] sm:$0xff] %v383
    %531 = vst [vmem:[#allocation7 + $0x170] sm:$0xff] %v384
    %532 = vst [vmem:[#allocation7 + $0x178] sm:$0xff] %v385
    %533 = vst [vmem:[#allocation7 + $0x180] sm:$0xff] %v386
    %534 = vst [vmem:[#allocation7 + $0x188] sm:$0xff] %v387
    %535 = vst [vmem:[#allocation7 + $0x190] sm:$0xff] %v388
    %536 = vst [vmem:[#allocation7 + $0x198] sm:$0xff] %v389
    %537 = vst [vmem:[#allocation7 + $0x1a0] sm:$0xff] %v390
    %538 = vst [vmem:[#allocation7 + $0x1a8] sm:$0xff] %v391
    %539 = vst [vmem:[#allocation7 + $0x1b0] sm:$0xff] %v392
    %540 = vst [vmem:[#allocation7 + $0x1b8] sm:$0xff] %v393
    %541 = vst [vmem:[#allocation7 + $0x1c0] sm:$0xff] %v394
    %542 = vst [vmem:[#allocation7 + $0x1c8] sm:$0xff] %v395
    %543 = vst [vmem:[#allocation7 + $0x1d0] sm:$0xff] %v396
    %544 = vst [vmem:[#allocation7 + $0x1d8] sm:$0xff] %v397
    %545 = vst [vmem:[#allocation7 + $0x1e0] sm:$0xff] %v398
    %546 = vst [vmem:[#allocation7 + $0x1e8] sm:$0xff] %v399
    %547 = vst [vmem:[#allocation7 + $0x1f0] sm:$0xff] %v400
    %548 = vst [vmem:[#allocation7 + $0x1f8] sm:$0xff] %v401
    %549 = vst [vmem:[#allocation7 + $0x200] sm:$0xff] %v402
    %550 = vst [vmem:[#allocation7 + $0x208] sm:$0xff] %v403
    %551 = vst [vmem:[#allocation7 + $0x210] sm:$0xff] %v404
    %552 = vst [vmem:[#allocation7 + $0x218] sm:$0xff] %v405
    %553 = vst [vmem:[#allocation7 + $0x220] sm:$0xff] %v406
    %554 = vst [vmem:[#allocation7 + $0x228] sm:$0xff] %v407
    %555 = vst [vmem:[#allocation7 + $0x230] sm:$0xff] %v408
    %556 = vst [vmem:[#allocation7 + $0x238] sm:$0xff] %v409
    %557 = vst [vmem:[#allocation7 + $0x240] sm:$0xff] %v410
    %558 = vst [vmem:[#allocation7 + $0x248] sm:$0xff] %v411
    %559 = vst [vmem:[#allocation7 + $0x250] sm:$0xff] %v412
    %560 = vst [vmem:[#allocation7 + $0x258] sm:$0xff] %v413
    %561 = vst [vmem:[#allocation7 + $0x260] sm:$0xff] %v414
    %562 = vst [vmem:[#allocation7 + $0x268] sm:$0xff] %v415
    %563 = vst [vmem:[#allocation7 + $0x270] sm:$0xff] %v416
    %564 = vst [vmem:[#allocation7 + $0x278] sm:$0xff] %v417
    %565 = vst [vmem:[#allocation7 + $0x280] sm:$0xff] %v418
    %566 = vst [vmem:[#allocation7 + $0x288] sm:$0xff] %v419
    %567 = vst [vmem:[#allocation7 + $0x290] sm:$0xff] %v420
    %568 = vst [vmem:[#allocation7 + $0x298] sm:$0xff] %v421
    %569 = vst [vmem:[#allocation7 + $0x2a0] sm:$0xff] %v422
    %570 = vst [vmem:[#allocation7 + $0x2a8] sm:$0xff] %v423
    %571 = vst [vmem:[#allocation7 + $0x2b0] sm:$0xff] %v424
    %572 = vst [vmem:[#allocation7 + $0x2b8] sm:$0xff] %v425
    %573 = vst [vmem:[#allocation7 + $0x2c0] sm:$0xff] %v426
    %574 = vst [vmem:[#allocation7 + $0x2c8] sm:$0xff] %v427
    %575 = vst [vmem:[#allocation7 + $0x2d0] sm:$0xff] %v428
    %576 = vst [vmem:[#allocation7 + $0x2d8] sm:$0xff] %v429
    %577 = vst [vmem:[#allocation7 + $0x2e0] sm:$0xff] %v430
    %578 = vst [vmem:[#allocation7 + $0x2e8] sm:$0xff] %v431
    %579 = vst [vmem:[#allocation7 + $0x2f0] sm:$0xff] %v432
    %580 = vst [vmem:[#allocation7 + $0x2f8] sm:$0xff] %v433
    %581 = vst [vmem:[#allocation7 + $0x300] sm:$0xff] %v434
    %582 = vst [vmem:[#allocation7 + $0x308] sm:$0xff] %v435
    %583 = vst [vmem:[#allocation7 + $0x310] sm:$0xff] %v436
    %584 = vst [vmem:[#allocation7 + $0x318] sm:$0xff] %v437
    %585 = vst [vmem:[#allocation7 + $0x320] sm:$0xff] %v438
    %586 = vst [vmem:[#allocation7 + $0x328] sm:$0xff] %v439
    %587 = vst [vmem:[#allocation7 + $0x330] sm:$0xff] %v440
    %588 = vst [vmem:[#allocation7 + $0x338] sm:$0xff] %v441
    %589 = vst [vmem:[#allocation7 + $0x340] sm:$0xff] %v442
    %590 = vst [vmem:[#allocation7 + $0x348] sm:$0xff] %v443
    %591 = vst [vmem:[#allocation7 + $0x350] sm:$0xff] %v444
    %592 = vst [vmem:[#allocation7 + $0x358] sm:$0xff] %v445
    %593 = vst [vmem:[#allocation7 + $0x360] sm:$0xff] %v446
    %594 = vst [vmem:[#allocation7 + $0x368] sm:$0xff] %v447
    %595 = vst [vmem:[#allocation7 + $0x370] sm:$0xff] %v448
    %596 = vst [vmem:[#allocation7 + $0x378] sm:$0xff] %v449
    %597 = vst [vmem:[#allocation7 + $0x380] sm:$0xff] %v450
    %598 = vst [vmem:[#allocation7 + $0x388] sm:$0xff] %v451
    %599 = vst [vmem:[#allocation7 + $0x390] sm:$0xff] %v452
    %600 = vst [vmem:[#allocation7 + $0x398] sm:$0xff] %v453
    %601 = vst [vmem:[#allocation7 + $0x3a0] sm:$0xff] %v454
    %602 = vst [vmem:[#allocation7 + $0x3a8] sm:$0xff] %v455
    %603 = vst [vmem:[#allocation7 + $0x3b0] sm:$0xff] %v456
    %604 = vst [vmem:[#allocation7 + $0x3b8] sm:$0xff] %v457
    %605 = vst [vmem:[#allocation7 + $0x3c0] sm:$0xff] %v458
    %606 = vst [vmem:[#allocation7 + $0x3c8] sm:$0xff] %v459
    %607 = vst [vmem:[#allocation7 + $0x3d0] sm:$0xff] %v460
    %608 = vst [vmem:[#allocation7 + $0x3d8] sm:$0xff] %v461
    %609 = vst [vmem:[#allocation7 + $0x3e0] sm:$0xff] %v462
    %610 = vst [vmem:[#allocation7 + $0x3e8] sm:$0xff] %v463
    %611 = vst [vmem:[#allocation7 + $0x3f0] sm:$0xff] %v464
    %612 = vst [vmem:[#allocation7 + $0x3f8] sm:$0xff] %v465
    %613 = vst [vmem:[#allocation7 + $0x400] sm:$0xff] %v466
    %614 = vst [vmem:[#allocation7 + $0x408] sm:$0xff] %v467
    %615 = vst [vmem:[#allocation7 + $0x410] sm:$0xff] %v468
    %616 = vst [vmem:[#allocation7 + $0x418] sm:$0xff] %v469
    %617 = vst [vmem:[#allocation7 + $0x420] sm:$0xff] %v470
    %618 = vst [vmem:[#allocation7 + $0x428] sm:$0xff] %v471
    %619 = vst [vmem:[#allocation7 + $0x430] sm:$0xff] %v472
    %620 = vst [vmem:[#allocation7 + $0x438] sm:$0xff] %v473
    %621 = vst [vmem:[#allocation7 + $0x440] sm:$0xff] %v474
    %622 = vst [vmem:[#allocation7 + $0x448] sm:$0xff] %v475
    %623 = vst [vmem:[#allocation7 + $0x450] sm:$0xff] %v476
    %624 = vst [vmem:[#allocation7 + $0x458] sm:$0xff] %v477
    %625 = vst [vmem:[#allocation7 + $0x460] sm:$0xff] %v478
    %626 = vst [vmem:[#allocation7 + $0x468] sm:$0xff] %v479
    %627 = vst [vmem:[#allocation7 + $0x470] sm:$0xff] %v480
    %628 = vst [vmem:[#allocation7 + $0x478] sm:$0xff] %v481
    %629 = vst [vmem:[#allocation7 + $0x480] sm:$0xff] %v482
    %630 = vst [vmem:[#allocation7 + $0x488] sm:$0xff] %v483
    %631 = vst [vmem:[#allocation7 + $0x490] sm:$0xff] %v484
    // Predicated region
    $region18: #{tpu_custom_call.1} parent=1 // pred_check
      _
    $region19: #{tpu_custom_call.1} parent=1 // pred_check_branch
      %633 = sbr.rel (0) target = $region21
    $region20: #{tpu_custom_call.1} parent=1 // pred_region
      %635 = vsyncadd [#allocation4], 0
      %s636 = sshll.u32 [#allocation7], 4
      %s637 = int_to_ptr.vmem [resolvable:$true] %s636
      %s638 = sshll.u32 %s2, 4
      %s639 = int_to_ptr.hbm [resolvable:$true] %s638
      %644 = dma.vmem_to_hbm [thread:$0]  %s637, 18816, %s639, [#allocation4], 6272, 6272, 392
    $region21: #{tpu_custom_call.1} parent=1 // pred_fallthru
      _
    // Predicated region
    $region22: #{tpu_custom_call.1} parent=1 // pred_check
      _
    $region23: #{tpu_custom_call.1} parent=1 // pred_check_branch
      %646 = sbr.rel (0) target = $region25
    $region24: #{tpu_custom_call.1} parent=1 // pred_region
      %648 = dma.done [#allocation4], 18816
    $region25: #{tpu_custom_call.1} parent=1 // pred_fallthru
      _
    %649 = vsyncpa [#allocation3], 1
    %650 = vsyncpa [#allocation6], 1
    %651 = vsyncpa [#allocation4], 1

</llo_original>
